<compile_context>
chip_gen: v5e
topology: v5e:2x2
jax: 0.10.0
libtpu: 0.0.40
codegen_flags: <defaults>
</compile_context>

<pallas_src>
import math
import functools

import jax
import jax.numpy as jnp
from jax import lax
from jax.experimental import pallas as pl
from jax.experimental.pallas import tpu as pltpu


# ---------------------------------------------------------------------------
# Kernel 1: row-tiled fused linear (matmul + bias) on the MXU
# ---------------------------------------------------------------------------
def _linear_kernel(x_ref, w_ref, b_ref, o_ref):
    # x_ref: (TM, Din)  w_ref: (Din, Dout)  b_ref: (1, Dout)  o_ref: (TM, Dout)
    acc = jnp.dot(x_ref[...], w_ref[...], preferred_element_type=jnp.float32)
    o_ref[...] = (acc + b_ref[...]).astype(o_ref.dtype)


def pallas_linear(x2d, w, b, out_dtype=None, block_m=256):
    """y = x2d @ w + b.  w is (Din, Dout) (transpose of nn.Linear weight)."""
    M, Din = x2d.shape
    Dout = w.shape[1]
    out_dtype = out_dtype if out_dtype is not None else x2d.dtype
    # ~256-512 row tiles keep the pipeline near HBM roofline on v5e/v6e/v7x;
    # small problems get a single full block.
    tm = M if M <= block_m else block_m
    grid = (pl.cdiv(M, tm),)

    in_isz = jnp.dtype(x2d.dtype).itemsize
    out_isz = jnp.dtype(out_dtype).itemsize
    cost = pl.CostEstimate(
        flops=2 * M * Din * Dout,
        transcendentals=0,
        bytes_accessed=(M * Din + Din * Dout) * in_isz + Dout * 4 + M * Dout * out_isz,
    )
    return pl.pallas_call(
        _linear_kernel,
        out_shape=jax.ShapeDtypeStruct((M, Dout), out_dtype),
        grid=grid,
        in_specs=[
            pl.BlockSpec((tm, Din), lambda i: (i, 0)),
            pl.BlockSpec((Din, Dout), lambda i: (0, 0)),  # weights stay resident
            pl.BlockSpec((1, Dout), lambda i: (0, 0)),    # bias stays resident
        ],
        out_specs=pl.BlockSpec((tm, Dout), lambda i: (i, 0)),
        compiler_params=pltpu.CompilerParams(
            dimension_semantics=("parallel",),
            vmem_limit_bytes=64 * 1024 * 1024,
        ),
        cost_estimate=cost,
    )(x2d, w, b.reshape(1, Dout))


# ---------------------------------------------------------------------------
# Kernel 2: multi-head scaled-dot-product attention, all heads per (b, q-tile)
# ---------------------------------------------------------------------------
def _attention_kernel(q_ref, k_ref, v_ref, m_ref, o_ref, *p_refs,
                      num_heads, scale):
    # q_ref: (TSq, D)  k_ref/v_ref: (Sk, D)  m_ref: (TSq, Sk) f32
    # o_ref: (TSq, D)  optional p_refs[0]: (H, TSq, Sk)
    q = q_ref[...]
    k = k_ref[...]
    v = v_ref[...]
    neg_mask = m_ref[...] * (-1000000000.0)          # f32, shared by all heads
    d_model = q.shape[-1]
    d_k = d_model // num_heads

    ctx_parts = []
    p_parts = []
    for h in range(num_heads):
        sl = slice(h * d_k, (h + 1) * d_k)
        qh = q[:, sl] * scale                        # scale S*d_k, not S*S
        kh = k[:, sl]
        vh = v[:, sl]
        # scores = (q * scale) @ k^T without materializing k.T
        s = lax.dot_general(qh, kh, (((1,), (1,)), ((), ())),
                            preferred_element_type=jnp.float32)
        s = s + neg_mask                             # mask add in f32
        s = s - jnp.max(s, axis=-1, keepdims=True)
        e = jnp.exp(s)
        p = e * pl.reciprocal(jnp.sum(e, axis=-1, keepdims=True), approx=True)
        ctx = jnp.dot(p.astype(vh.dtype), vh, preferred_element_type=jnp.float32)
        ctx_parts.append(ctx)
        if p_refs:
            p_parts.append(p)

    # Single lane-dense store of the concatenated heads (last dim = d_model).
    o_ref[...] = jnp.concatenate(ctx_parts, axis=-1).astype(o_ref.dtype)
    if p_refs:
        p_refs[0][...] = jnp.stack(p_parts, axis=0).astype(p_refs[0].dtype)


def pallas_attention(q, k, v, mask, *, num_heads, scale,
                     return_attn=False, q_block=256):
    # q: (B, Sq, D)  k/v: (B, Sk, D)  mask: (B, Sq, Sk) f32 (1 => suppressed)
    B, Sq, D = q.shape
    Sk = k.shape[1]
    tq = Sq if Sq <= q_block else q_block
    grid = (B, pl.cdiv(Sq, tq))

    kernel = functools.partial(_attention_kernel, num_heads=num_heads, scale=scale)
    in_specs = [
        pl.BlockSpec((None, tq, D), lambda b, qi: (b, qi, 0)),
        pl.BlockSpec((None, Sk, D), lambda b, qi: (b, 0, 0)),
        pl.BlockSpec((None, Sk, D), lambda b, qi: (b, 0, 0)),
        pl.BlockSpec((None, tq, Sk), lambda b, qi: (b, qi, 0)),
    ]
    out_shape = [jax.ShapeDtypeStruct((B, Sq, D), q.dtype)]
    out_specs = [pl.BlockSpec((None, tq, D), lambda b, qi: (b, qi, 0))]
    if return_attn:
        out_shape.append(jax.ShapeDtypeStruct((B, num_heads, Sq, Sk), jnp.float32))
        out_specs.append(
            pl.BlockSpec((None, num_heads, tq, Sk), lambda b, qi: (b, 0, qi, 0)))

    isz = jnp.dtype(q.dtype).itemsize
    bytes_accessed = (2 * B * Sq * D + 2 * B * Sk * D) * isz + B * Sq * Sk * 4
    if return_attn:
        bytes_accessed += B * num_heads * Sq * Sk * 4
    cost = pl.CostEstimate(
        flops=4 * B * Sq * Sk * D,                   # QK^T + PV over all heads
        transcendentals=B * num_heads * Sq * Sk,     # exp
        bytes_accessed=bytes_accessed,
    )

    return pl.pallas_call(
        kernel,
        out_shape=tuple(out_shape) if return_attn else out_shape[0],
        grid=grid,
        in_specs=in_specs,
        out_specs=tuple(out_specs) if return_attn else out_specs[0],
        compiler_params=pltpu.CompilerParams(
            dimension_semantics=("parallel", "parallel"),
            vmem_limit_bytes=64 * 1024 * 1024,
        ),
        cost_estimate=cost,
    )(q, k, v, mask)


# ---------------------------------------------------------------------------
# Module: parameters + forward pass
# ---------------------------------------------------------------------------
def init_mha_params(key, d_model):
    ks = jax.random.split(key, 8)
    bound = 1.0 / math.sqrt(d_model)

    def w(k):
        return (jax.random.uniform(k, (d_model, d_model), jnp.float32) - 0.5) * 2 * bound

    def b(k):
        return (jax.random.uniform(k, (d_model,), jnp.float32) - 0.5) * 2 * bound

    return {
        "wq_w": w(ks[0]), "wq_b": b(ks[1]),
        "wk_w": w(ks[2]), "wk_b": b(ks[3]),
        "wv_w": w(ks[4]), "wv_b": b(ks[5]),
        "dense_w": w(ks[6]), "dense_b": b(ks[7]),
    }


def multi_headed_attention(params, query, key, value, num_heads, mask=None,
                           return_attn=False, compute_dtype=jnp.bfloat16):
    B, Sq, D = query.shape
    Sk = key.shape[1]
    assert D % num_heads == 0
    d_k = D // num_heads
    out_dtype = query.dtype
    cd = compute_dtype

    # Q/K/V projections in bf16 with f32 accumulation; activations stay in the
    # (B, S, D) layout so no transpose/head-split copies sit between kernels.
    q = pallas_linear(query.reshape(B * Sq, D).astype(cd),
                      params["wq_w"].astype(cd), params["wq_b"],
                      out_dtype=cd).reshape(B, Sq, D)
    k = pallas_linear(key.reshape(B * Sk, D).astype(cd),
                      params["wk_w"].astype(cd), params["wk_b"],
                      out_dtype=cd).reshape(B, Sk, D)
    v = pallas_linear(value.reshape(B * Sk, D).astype(cd),
                      params["wv_w"].astype(cd), params["wv_b"],
                      out_dtype=cd).reshape(B, Sk, D)

    # Mask convention matches the PyTorch module: scores += mask * -1e9, i.e.
    # mask==1 suppresses a position; it broadcasts over heads (unsqueeze(1)).
    if mask is None:
        mask = jnp.zeros((B, Sq, Sk), jnp.float32)
    else:
        mask = mask.astype(jnp.float32)

    scale = 1.0 / math.sqrt(d_k)
    attn_out = pallas_attention(q, k, v, mask, num_heads=num_heads, scale=scale,
                                return_attn=return_attn)
    if return_attn:
        x, p_attn = attn_out
    else:
        x, p_attn = attn_out, None

    x = pallas_linear(x.reshape(B * Sq, D),
                      params["dense_w"].astype(cd), params["dense_b"],
                      out_dtype=out_dtype).reshape(B, Sq, D)

    # TODO(synk): nn.Dropout(p=0.1) is the identity in eval mode; training-mode
    # stochastic dropout would require pltpu.prng_seed/prng_random_bits in-kernel.
    return x, p_attn


if __name__ == "__main__":
    B, S, D, H = 2, 8, 32, 4
    root = jax.random.PRNGKey(0)
    k_q, k_k, k_v, k_m, k_p = jax.random.split(root, 5)

    query = jax.random.normal(k_q, (B, S, D), jnp.float32)
    key_in = jax.random.normal(k_k, (B, S, D), jnp.float32)
    value = jax.random.normal(k_v, (B, S, D), jnp.float32)
    # mask entries in {0, 1}; 1 => position is suppressed (scores += -1e9)
    mask = (jax.random.uniform(k_m, (B, S, S)) > 0.8).astype(jnp.float32)

    params = init_mha_params(k_p, D)

    # Default (fast) path: no attention-probability write-out.
    out, _ = multi_headed_attention(params, query, key_in, value, H, mask=mask)
    jax.block_until_ready(out)
    assert out.shape == (B, S, D)
    assert out.dtype == jnp.float32
    assert bool(jnp.all(jnp.isfinite(out)))

    # Optional path: also return p_attn (mirrors the module's self.attn).
    out2, attn = multi_headed_attention(params, query, key_in, value, H,
                                        mask=mask, return_attn=True)
    jax.block_until_ready(out2)
    jax.block_until_ready(attn)
    assert out2.shape == (B, S, D)
    assert attn.shape == (B, H, S, S)
    assert bool(jnp.all(jnp.abs(jnp.sum(attn, axis=-1) - 1.0) < 1e-2))

    print("KERNEL_OK")
</pallas_src>

<mosaic_0001>
module attributes {stable_mosaic.version = 11 : i64} {
  func.func @_linear_kernel(%arg0: i32, %arg1: memref<16x32xbf16, #tpu.memory_space<vmem>>, %arg2: memref<32x32xbf16, #tpu.memory_space<vmem>>, %arg3: memref<1x32xf32, #tpu.memory_space<vmem>>, %arg4: memref<16x32xbf16, #tpu.memory_space<vmem>>) attributes {dimension_semantics = [#tpu.dimension_semantics<parallel>], iteration_bounds = array<i64: 1>, scalar_prefetch = 0 : i64, scratch_operands = 0 : i64, tpu.core_type = #tpu.core_type<tc>, window_params = [{transform_indices = @transform_0, window_bounds = array<i64: 16, 32>}, {pipeline_mode = #tpu.pipeline_mode<synchronous>, transform_indices = @transform_1, window_bounds = array<i64: 32, 32>}, {pipeline_mode = #tpu.pipeline_mode<synchronous>, transform_indices = @transform_2, window_bounds = array<i64: 1, 32>}, {transform_indices = @transform_3, window_bounds = array<i64: 16, 32>}]} {
    %c0 = arith.constant 0 : index
    %c0_0 = arith.constant 0 : index
    %0 = vector.load %arg1[%c0, %c0_0] : memref<16x32xbf16, #tpu.memory_space<vmem>>, vector<16x32xbf16>
    %c0_1 = arith.constant 0 : index
    %c0_2 = arith.constant 0 : index
    %1 = vector.load %arg2[%c0_1, %c0_2] : memref<32x32xbf16, #tpu.memory_space<vmem>>, vector<32x32xbf16>
    %cst = arith.constant dense<0.000000e+00> : vector<16x32xf32>
    %2 = tpu.matmul %0, %1, %cst {dimension_numbers = #tpu.dot_dimension_numbers<[1], [0], [0], [1], [0, 0, 1, 1], [], []>} : vector<16x32xbf16>, vector<32x32xbf16>, vector<16x32xf32> -> vector<16x32xf32>
    %c0_3 = arith.constant 0 : index
    %c0_4 = arith.constant 0 : index
    %3 = vector.load %arg3[%c0_3, %c0_4] : memref<1x32xf32, #tpu.memory_space<vmem>>, vector<1x32xf32>
    %4 = vector.broadcast %3 : vector<1x32xf32> to vector<16x32xf32>
    %5 = arith.addf %2, %4 : vector<16x32xf32>
    %6 = arith.truncf %5 : vector<16x32xf32> to vector<16x32xbf16>
    %c0_5 = arith.constant 0 : index
    %c0_6 = arith.constant 0 : index
    %7 = vector.load %arg4[%c0_5, %c0_6] : memref<16x32xbf16, #tpu.memory_space<vmem>>, vector<16x32xbf16>
    tpu.vector_store %arg4[%c0_5, %c0_6], %6 {strides = array<i32>} : memref<16x32xbf16, #tpu.memory_space<vmem>>, vector<16x32xbf16>,
    return
  }
  func.func @transform_0(%arg0: i32) -> (i32, i32) {
    %c0_i32 = arith.constant 0 : i32
    %c0_i32_0 = arith.constant 0 : i32
    return %arg0, %c0_i32 : i32, i32
  }
  func.func @transform_1(%arg0: i32) -> (i32, i32) {
    %c0_i32 = arith.constant 0 : i32
    %c0_i32_0 = arith.constant 0 : i32
    %c0_i32_1 = arith.constant 0 : i32
    return %c0_i32, %c0_i32_0 : i32, i32
  }
  func.func @transform_2(%arg0: i32) -> (i32, i32) {
    %c0_i32 = arith.constant 0 : i32
    %c0_i32_0 = arith.constant 0 : i32
    %c0_i32_1 = arith.constant 0 : i32
    return %c0_i32, %c0_i32_0 : i32, i32
  }
  func.func @transform_3(%arg0: i32) -> (i32, i32) {
    %c0_i32 = arith.constant 0 : i32
    %c0_i32_0 = arith.constant 0 : i32
    return %arg0, %c0_i32 : i32, i32
  }
}

</mosaic_0001>

<llo_original>
// kernel: tpu_custom_call.1
$region0: #{tpu_custom_call.1}
  #allocation0 [shape = 'u32[]', space=smem, size = 0x4, offset = 0x4, fixed_abs, tag = 'smem constant byte address 0x4 - core index']
  #allocation1 [shape = 'u32[72,128]{1,0:T(1,128)}', space=vmem, size = 0x9000, scoped, tag = 'internal scratch']
  %s0 = inlined_call_operand.hbm [shape: bf16[16,32], index: 0, kind: input, shape index: {}]
  %s1 = inlined_call_operand.hbm [shape: bf16[32,32], index: 1, kind: input, shape index: {}]
  %s2 = inlined_call_operand.vmem [shape: f32[1,32], index: 2, kind: input, shape index: {}]
  %s3 = inlined_call_operand.hbm [shape: bf16[16,32], index: 3, kind: output, shape index: {}]
  %s4 = sld [smem:[#allocation0]]
  $region30: #{tpu_custom_call.1} parent=0
    _
  %s6 = ssub.s32 1, %s4
  %s7 = scalar_select 0, %s6, %s4
  $region1: #{tpu_custom_call.1} parent=0
    #allocation2 [shape = 'u8[4096]{0}', space=vmem, size = 0x1000, scoped, tag = 'input window, operand 0, single buffered']
    #allocation3 [shape = 's32[1]{0}', space=sflag, size = 0x4, scoped, tag = 'scoped memory for tpu_custom_call.1']
    #allocation4 [shape = 's32[1]{0}', space=sflag, size = 0x4, scoped, tag = 'scoped memory for tpu_custom_call.1']
    #allocation5 [shape = 'u8[8192]{0}', space=vmem, size = 0x2000, scoped, tag = 'input window, operand 1, single buffered']
    #allocation6 [shape = 's32[1]{0}', space=sflag, size = 0x4, scoped, tag = 'scoped memory for tpu_custom_call.1']
    #allocation7 [shape = 'u8[4096]{0}', space=vmem, size = 0x1000, scoped, tag = 'output window, operand 0, single buffered']
    %8 = vsyncpa [#allocation3], 0
    %9 = vsyncpa [#allocation6], 0
    %10 = vsyncpa [#allocation4], 0
    // Predicated region
    $region2: #{tpu_custom_call.1} parent=1 // pred_check
      _
    $region3: #{tpu_custom_call.1} parent=1 // pred_check_branch
      %12 = sbr.rel (0) target = $region5
    $region4: #{tpu_custom_call.1} parent=1 // pred_region
      %14 = vsyncadd [#allocation3], 0
      %s15 = sshll.u32 %s0, 4
      %s16 = int_to_ptr.hbm [resolvable:$true] %s15
      %s17 = sshll.u32 [#allocation2], 4
      %s18 = int_to_ptr.vmem [resolvable:$true] %s17
      %23 = dma.hbm_to_vmem [thread:$0]  %s16, 128, %s18, [#allocation3], 64, 64, 4
    $region5: #{tpu_custom_call.1} parent=1 // pred_fallthru
      _
    // Predicated region
    $region6: #{tpu_custom_call.1} parent=1 // pred_check
      _
    $region7: #{tpu_custom_call.1} parent=1 // pred_check_branch
      %25 = sbr.rel (0) target = $region9
    $region8: #{tpu_custom_call.1} parent=1 // pred_region
      %27 = vsyncadd [#allocation6], 0
      %s28 = sshll.u32 %s1, 4
      %s29 = int_to_ptr.hbm [resolvable:$true] %s28
      %s30 = sshll.u32 [#allocation5], 4
      %s31 = int_to_ptr.vmem [resolvable:$true] %s30
      %36 = dma.hbm_to_vmem [thread:$0]  %s29, 256, %s31, [#allocation6], 64, 64, 4
    $region9: #{tpu_custom_call.1} parent=1 // pred_fallthru
      _
    // Predicated region
    $region10: #{tpu_custom_call.1} parent=1 // pred_check
      _
    $region11: #{tpu_custom_call.1} parent=1 // pred_check_branch
      %38 = sbr.rel (0) target = $region13
    $region12: #{tpu_custom_call.1} parent=1 // pred_region
      _
    $region13: #{tpu_custom_call.1} parent=1 // pred_fallthru
      _
    // Predicated region
    $region14: #{tpu_custom_call.1} parent=1 // pred_check
      _
    $region15: #{tpu_custom_call.1} parent=1 // pred_check_branch
      %40 = sbr.rel (0) target = $region17
    $region16: #{tpu_custom_call.1} parent=1 // pred_region
      %42 = dma.done [#allocation3], 128
    $region17: #{tpu_custom_call.1} parent=1 // pred_fallthru
      _
    // Predicated region
    $region18: #{tpu_custom_call.1} parent=1 // pred_check
      _
    $region19: #{tpu_custom_call.1} parent=1 // pred_check_branch
      %44 = sbr.rel (0) target = $region21
    $region20: #{tpu_custom_call.1} parent=1 // pred_region
      %46 = dma.done [#allocation6], 256
    $region21: #{tpu_custom_call.1} parent=1 // pred_fallthru
      _
    %v48 = vld [vmem:[#allocation2] sm:$0xf]
    %v49 = vld [vmem:[#allocation2 + $0x4] sm:$0xf]
    %v50 = vld [vmem:[#allocation5] sm:$0xf]
    %v51 = vld [vmem:[#allocation5 + $0x4] sm:$0xf]
    %v52 = vld [vmem:[#allocation5 + $0x8] sm:$0xf]
    %v53 = vld [vmem:[#allocation5 + $0xc] sm:$0xf]
    %v54 = vld [vmem:[%s2] sm:$0x1]
    %v56 = vperm.slane %v54, 0
    %v60 = vunpack.c.l.b16 %v48
    %v61 = vunpack.c.l.b16 %v49
    %v62 = vpack.c.b16 %v61, %v60
    %v67 = vunpack.c.l.b16 %v50
    %v68 = vunpack.c.l.b16 %v51
    %v69 = vunpack.c.l.b16 %v52
    %v70 = vunpack.c.l.b16 %v53
    %v71 = vpack.c.b16 %v68, %v67
    %v72 = vpack.c.b16 %v70, %v69
    %vm75 = vcmask 261120
    %v77 = vsel %vm75, %v62, 0
    %79 = vmatpush.bf16.msra.mxu0 0
    %80 = vmatpush.bf16.msra.mxu0 0
    %81 = vmatpush.bf16.msra.mxu0 0
    %82 = vmatpush.bf16.msra.mxu0 0
    %83 = vmatpush.bf16.msra.mxu0 0
    %84 = vmatpush.bf16.msra.mxu0 0
    %85 = vmatpush.bf16.msra.mxu0 %v72
    %86 = vmatpush.bf16.msra.mxu0 %v71
    %87 = vmatmul.bf16.gmra.mxu0 %v77
    %v88 = vpop.f32.mrf.mxu0
    %v89 = vadd.f32 %v56, %v88
    %v90 = vpop.f32.mrf.mxu0
    %v91 = vadd.f32 %v56, %v90
    %92 = vdwg.mxu0
    %v93 = vpack.c.bf16 %v89, %v89
    %v94 = vpack.c.bf16 %v91, %v91
    %vm95 = vcmask 257024
    %96 = vst.msk [vmem:[#allocation7] sm:$0xf] %vm95, %v93
    %97 = vst.msk [vmem:[#allocation7 + $0x4] sm:$0xf] %vm95, %v94
    // Predicated region
    $region22: #{tpu_custom_call.1} parent=1 // pred_check
      _
    $region23: #{tpu_custom_call.1} parent=1 // pred_check_branch
      %99 = sbr.rel (0) target = $region25
    $region24: #{tpu_custom_call.1} parent=1 // pred_region
      %101 = vsyncadd [#allocation4], 0
      %s102 = sshll.u32 [#allocation7], 4
      %s103 = int_to_ptr.vmem [resolvable:$true] %s102
      %s104 = sshll.u32 %s3, 4
      %s105 = int_to_ptr.hbm [resolvable:$true] %s104
      %110 = dma.vmem_to_hbm [thread:$0]  %s103, 128, %s105, [#allocation4], 64, 64, 4
    $region25: #{tpu_custom_call.1} parent=1 // pred_fallthru
      _
    // Predicated region
    $region26: #{tpu_custom_call.1} parent=1 // pred_check
      _
    $region27: #{tpu_custom_call.1} parent=1 // pred_check_branch
      %112 = sbr.rel (0) target = $region29
    $region28: #{tpu_custom_call.1} parent=1 // pred_region
      %114 = dma.done [#allocation4], 128
    $region29: #{tpu_custom_call.1} parent=1 // pred_fallthru
      _
    %115 = vsyncpa [#allocation3], 1
    %116 = vsyncpa [#allocation6], 1
    %117 = vsyncpa [#allocation4], 1

</llo_original>
